<compile_context>
chip_gen: v5e
topology: v5e:2x2
jax: 0.10.0
libtpu: 0.0.40
codegen_flags: <defaults>
</compile_context>

<pallas_src>
import functools
import math

import jax
import jax.numpy as jnp
from jax import lax
from jax.experimental import pallas as pl
from jax.experimental.pallas import tpu as pltpu


def _round_up(x, m):
    return (x + m - 1) // m * m


def _embedding_gather_kernel(ids_ref, emb_hbm, out_ref, gbuf, sems, *,
                             tokens_per_block, num_slots, vocab_size, scale):
    """Gather `tokens_per_block` embedding rows from HBM, scale, store."""
    base = pl.program_id(0) * tokens_per_block

    def start_copy(t):
        # Clamp protects against out-of-range token ids (unchecked HBM reads).
        row = jnp.clip(ids_ref[base + t], 0, vocab_size - 1)
        pltpu.make_async_copy(emb_hbm.at[row], gbuf.at[t],
                              sems.at[t % num_slots]).start()

    def wait_copy(t):
        # Dummy row-0 source: only copy size + semaphore matter for wait().
        pltpu.make_async_copy(emb_hbm.at[0], gbuf.at[t],
                              sems.at[t % num_slots]).wait()

    # Prologue: put `num_slots` row copies in flight.
    @pl.loop(0, num_slots)
    def _(t):
        start_copy(t)

    # Steady state: retire copy t, immediately launch copy t + num_slots.
    def body(t, carry):
        wait_copy(t)

        @pl.when(t + num_slots < tokens_per_block)
        def _():
            start_copy(t + num_slots)

        return carry

    lax.fori_loop(0, tokens_per_block, body, 0)

    # Fused sqrt(d_model) scaling on the VPU (free under a DMA-bound kernel).
    out_ref[...] = (gbuf[...] * scale).astype(out_ref.dtype)


def embedding_forward(x, emb_table, *, tokens_per_block=128, num_slots=8):
    """x: (batch, seq) int token ids; emb_table: (vocab_size, d_model) f32."""
    batch, seq = x.shape
    vocab_size, d_model = emb_table.shape
    n = batch * seq
    scale = math.sqrt(d_model)

    # Token-block size: multiple of 8 (sublane), no larger than the padded N.
    tpb = min(tokens_per_block, _round_up(n, 8))
    tpb = _round_up(tpb, 8)
    num_slots = max(1, min(num_slots, tpb))
    n_pad = _round_up(n, tpb)

    ids = x.reshape(n).astype(jnp.int32)
    if n_pad != n:
        # Padded ids gather row 0; the extra rows are sliced off below.
        ids = jnp.pad(ids, (0, n_pad - n))

    kernel = functools.partial(
        _embedding_gather_kernel,
        tokens_per_block=tpb, num_slots=num_slots,
        vocab_size=vocab_size, scale=scale)

    out = pl.pallas_call(
        kernel,
        out_shape=jax.ShapeDtypeStruct((n_pad, d_model), emb_table.dtype),
        grid_spec=pltpu.PrefetchScalarGridSpec(
            num_scalar_prefetch=1,                         # ids -> SMEM
            grid=(n_pad // tpb,),
            in_specs=[pl.BlockSpec(memory_space=pl.ANY)],  # table stays in HBM
            out_specs=pl.BlockSpec((tpb, d_model), lambda b, ids: (b, 0)),
            scratch_shapes=[
                pltpu.VMEM((tpb, d_model), emb_table.dtype),  # gather buffer
                pltpu.SemaphoreType.DMA((num_slots,)),        # in-flight slots
            ],
        ),
        compiler_params=pltpu.CompilerParams(
            dimension_semantics=("parallel",),   # v7x: split token blocks over TCs
        ),
        cost_estimate=pl.CostEstimate(
            flops=n_pad * d_model,               # the scale multiply
            transcendentals=0,
            bytes_accessed=2 * n_pad * d_model * emb_table.dtype.itemsize
                           + n_pad * 4,
        ),
    )(ids, emb_table)

    return out[:n].reshape(batch, seq, d_model)


if __name__ == "__main__":
    vocab_size = 64
    d_model = 32
    batch, seq = 2, 8

    key = jax.random.PRNGKey(0)
    k_emb, k_ids = jax.random.split(key)

    # torch.nn.Embedding default init: N(0, 1)
    emb_table = jax.random.normal(k_emb, (vocab_size, d_model), dtype=jnp.float32)
    x = jax.random.randint(k_ids, (batch, seq), 0, vocab_size, dtype=jnp.int32)

    out = embedding_forward(x, emb_table)
    out = jax.block_until_ready(out)

    # Reference: embedding lookup * sqrt(d_model)
    ref = emb_table[x] * math.sqrt(d_model)
    assert out.shape == (batch, seq, d_model)
    assert jnp.allclose(out, ref, atol=1e-5, rtol=1e-5)

    print("KERNEL_OK")
</pallas_src>

<mosaic_0001>
module attributes {stable_mosaic.version = 11 : i64} {
  func.func @_embedding_gather_kernel(%arg0: i32, %arg1: memref<16xi32, #tpu.memory_space<smem>>, %arg2: memref<64x32xf32, #tpu.memory_space<any>>, %arg3: memref<16x32xf32, #tpu.memory_space<vmem>>, %arg4: memref<16x32xf32, #tpu.memory_space<vmem>>, %arg5: memref<8x!tpu.dma_semaphore, #tpu.memory_space<semaphore_mem>>) attributes {dimension_semantics = [#tpu.dimension_semantics<parallel>], iteration_bounds = array<i64: 1>, scalar_prefetch = 1 : i64, scratch_operands = 2 : i64, tpu.core_type = #tpu.core_type<tc>, window_params = [{}, {transform_indices = @transform_1, window_bounds = array<i64: 16, 32>}]} {
    %c16_i32 = arith.constant 16 : i32
    %0 = arith.muli %arg0, %c16_i32 : i32
    %c0_i32 = arith.constant 0 : i32
    %c8_i32 = arith.constant 8 : i32
    %1 = arith.addi %c0_i32, %c8_i32 : i32
    %c1_i32 = arith.constant 1 : i32
    scf.for %arg6 = %c0_i32 to %1 step %c1_i32  : i32 {
      %c1_i32_8 = arith.constant 1 : i32
      %7 = arith.muli %arg6, %c1_i32_8 : i32
      %c0_i32_9 = arith.constant 0 : i32
      %8 = arith.addi %c0_i32_9, %7 : i32
      %9 = arith.addi %0, %8 : i32
      %10 = arith.index_cast %9 : i32 to index
      %11 = memref.load %arg1[%10] : memref<16xi32, #tpu.memory_space<smem>>
      %c0_i32_10 = arith.constant 0 : i32
      %c63_i32 = arith.constant 63 : i32
      %12 = arith.maxsi %c0_i32_10, %11 : i32
      %13 = arith.minsi %c63_i32, %12 : i32
      %c8_i32_11 = arith.constant 8 : i32
      %c0_i32_12 = arith.constant 0 : i32
      %14 = arith.cmpi eq, %c8_i32_11, %c0_i32_12 : i32
      %c1_i32_13 = arith.constant 1 : i32
      %15 = arith.select %14, %c1_i32_13, %c8_i32_11 : i32
      %16 = arith.remsi %8, %15 : i32
      %c0_i32_14 = arith.constant 0 : i32
      %17 = arith.cmpi ne, %16, %c0_i32_14 : i32
      %c0_i32_15 = arith.constant 0 : i32
      %18 = arith.cmpi slt, %16, %c0_i32_15 : i32
      %c0_i32_16 = arith.constant 0 : i32
      %19 = arith.cmpi slt, %15, %c0_i32_16 : i32
      %20 = arith.xori %18, %19 : i1
      %21 = arith.andi %20, %17 : i1
      %22 = arith.addi %16, %15 : i32
      %23 = arith.select %21, %22, %16 : i32
      %c0_i32_17 = arith.constant 0 : i32
      %24 = tpu.memref_slice %arg2[%13, %c0_i32_17] : memref<64x32xf32, #tpu.memory_space<any>> -> memref<1x32xf32, #tpu.memory_space<any>>
      %25 = tpu.memref_squeeze %24 : memref<1x32xf32, #tpu.memory_space<any>> -> memref<32xf32, #tpu.memory_space<any>>
      %c0_i32_18 = arith.constant 0 : i32
      %26 = tpu.memref_slice %arg4[%8, %c0_i32_18] : memref<16x32xf32, #tpu.memory_space<vmem>> -> memref<1x32xf32, #tpu.memory_space<vmem>>
      %27 = tpu.memref_squeeze %26 : memref<1x32xf32, #tpu.memory_space<vmem>> -> memref<32xf32, #tpu.memory_space<vmem>>
      %28 = tpu.memref_slice %arg5[%23] : memref<8x!tpu.dma_semaphore, #tpu.memory_space<semaphore_mem>> -> memref<1x!tpu.dma_semaphore, #tpu.memory_space<semaphore_mem>>
      %29 = tpu.memref_squeeze %28 : memref<1x!tpu.dma_semaphore, #tpu.memory_space<semaphore_mem>> -> memref<!tpu.dma_semaphore, #tpu.memory_space<semaphore_mem>>
      tpu.enqueue_dma source(%25 : memref<32xf32, #tpu.memory_space<any>>) target(%27 : memref<32xf32, #tpu.memory_space<vmem>>) target_semaphore(%29 : memref<!tpu.dma_semaphore, #tpu.memory_space<semaphore_mem>>)
    }
    %c8_i32_0 = arith.constant 8 : i32
    %c0_i32_1 = arith.constant 0 : i32
    %c16_i32_2 = arith.constant 16 : i32
    %2 = arith.addi %c0_i32_1, %c16_i32_2 : i32
    %c1_i32_3 = arith.constant 1 : i32
    scf.for %arg6 = %c0_i32_1 to %2 step %c1_i32_3  : i32 {
      %c8_i32_8 = arith.constant 8 : i32
      %c0_i32_9 = arith.constant 0 : i32
      %7 = arith.cmpi eq, %c8_i32_8, %c0_i32_9 : i32
      %c1_i32_10 = arith.constant 1 : i32
      %8 = arith.select %7, %c1_i32_10, %c8_i32_8 : i32
      %9 = arith.remsi %arg6, %8 : i32
      %c0_i32_11 = arith.constant 0 : i32
      %10 = arith.cmpi ne, %9, %c0_i32_11 : i32
      %c0_i32_12 = arith.constant 0 : i32
      %11 = arith.cmpi slt, %9, %c0_i32_12 : i32
      %c0_i32_13 = arith.constant 0 : i32
      %12 = arith.cmpi slt, %8, %c0_i32_13 : i32
      %13 = arith.xori %11, %12 : i1
      %14 = arith.andi %13, %10 : i1
      %15 = arith.addi %9, %8 : i32
      %16 = arith.select %14, %15, %9 : i32
      %c0_i32_14 = arith.constant 0 : i32
      %c0_i32_15 = arith.constant 0 : i32
      %17 = tpu.memref_slice %arg2[%c0_i32_14, %c0_i32_15] : memref<64x32xf32, #tpu.memory_space<any>> -> memref<1x32xf32, #tpu.memory_space<any>>
      %18 = tpu.memref_squeeze %17 : memref<1x32xf32, #tpu.memory_space<any>> -> memref<32xf32, #tpu.memory_space<any>>
      %c0_i32_16 = arith.constant 0 : i32
      %19 = tpu.memref_slice %arg4[%arg6, %c0_i32_16] : memref<16x32xf32, #tpu.memory_space<vmem>> -> memref<1x32xf32, #tpu.memory_space<vmem>>
      %20 = tpu.memref_squeeze %19 : memref<1x32xf32, #tpu.memory_space<vmem>> -> memref<32xf32, #tpu.memory_space<vmem>>
      %21 = tpu.memref_slice %arg5[%16] : memref<8x!tpu.dma_semaphore, #tpu.memory_space<semaphore_mem>> -> memref<1x!tpu.dma_semaphore, #tpu.memory_space<semaphore_mem>>
      %22 = tpu.memref_squeeze %21 : memref<1x!tpu.dma_semaphore, #tpu.memory_space<semaphore_mem>> -> memref<!tpu.dma_semaphore, #tpu.memory_space<semaphore_mem>>
      tpu.wait_dma2 semaphore(%22 : memref<!tpu.dma_semaphore, #tpu.memory_space<semaphore_mem>>) src(%18 : memref<32xf32, #tpu.memory_space<any>>) dst(%20 : memref<32xf32, #tpu.memory_space<vmem>>)
      %c8_i32_17 = arith.constant 8 : i32
      %23 = arith.addi %arg6, %c8_i32_17 : i32
      %c16_i32_18 = arith.constant 16 : i32
      %24 = arith.cmpi slt, %23, %c16_i32_18 : i32
      %25 = arith.extui %24 : i1 to i32
      %c0_i32_19 = arith.constant 0 : i32
      %26 = arith.cmpi ne, %25, %c0_i32_19 : i32
      scf.if %26 {
        %c8_i32_20 = arith.constant 8 : i32
        %27 = arith.addi %arg6, %c8_i32_20 : i32
        %28 = arith.addi %0, %27 : i32
        %29 = arith.index_cast %28 : i32 to index
        %30 = memref.load %arg1[%29] : memref<16xi32, #tpu.memory_space<smem>>
        %c0_i32_21 = arith.constant 0 : i32
        %c63_i32 = arith.constant 63 : i32
        %31 = arith.maxsi %c0_i32_21, %30 : i32
        %32 = arith.minsi %c63_i32, %31 : i32
        %c8_i32_22 = arith.constant 8 : i32
        %c0_i32_23 = arith.constant 0 : i32
        %33 = arith.cmpi eq, %c8_i32_22, %c0_i32_23 : i32
        %c1_i32_24 = arith.constant 1 : i32
        %34 = arith.select %33, %c1_i32_24, %c8_i32_22 : i32
        %35 = arith.remsi %27, %34 : i32
        %c0_i32_25 = arith.constant 0 : i32
        %36 = arith.cmpi ne, %35, %c0_i32_25 : i32
        %c0_i32_26 = arith.constant 0 : i32
        %37 = arith.cmpi slt, %35, %c0_i32_26 : i32
        %c0_i32_27 = arith.constant 0 : i32
        %38 = arith.cmpi slt, %34, %c0_i32_27 : i32
        %39 = arith.xori %37, %38 : i1
        %40 = arith.andi %39, %36 : i1
        %41 = arith.addi %35, %34 : i32
        %42 = arith.select %40, %41, %35 : i32
        %c0_i32_28 = arith.constant 0 : i32
        %43 = tpu.memref_slice %arg2[%32, %c0_i32_28] : memref<64x32xf32, #tpu.memory_space<any>> -> memref<1x32xf32, #tpu.memory_space<any>>
        %44 = tpu.memref_squeeze %43 : memref<1x32xf32, #tpu.memory_space<any>> -> memref<32xf32, #tpu.memory_space<any>>
        %c0_i32_29 = arith.constant 0 : i32
        %45 = tpu.memref_slice %arg4[%27, %c0_i32_29] : memref<16x32xf32, #tpu.memory_space<vmem>> -> memref<1x32xf32, #tpu.memory_space<vmem>>
        %46 = tpu.memref_squeeze %45 : memref<1x32xf32, #tpu.memory_space<vmem>> -> memref<32xf32, #tpu.memory_space<vmem>>
        %47 = tpu.memref_slice %arg5[%42] : memref<8x!tpu.dma_semaphore, #tpu.memory_space<semaphore_mem>> -> memref<1x!tpu.dma_semaphore, #tpu.memory_space<semaphore_mem>>
        %48 = tpu.memref_squeeze %47 : memref<1x!tpu.dma_semaphore, #tpu.memory_space<semaphore_mem>> -> memref<!tpu.dma_semaphore, #tpu.memory_space<semaphore_mem>>
        tpu.enqueue_dma source(%44 : memref<32xf32, #tpu.memory_space<any>>) target(%46 : memref<32xf32, #tpu.memory_space<vmem>>) target_semaphore(%48 : memref<!tpu.dma_semaphore, #tpu.memory_space<semaphore_mem>>)
      } else {
      }
    }
    %c16_i32_4 = arith.constant 16 : i32
    %c0 = arith.constant 0 : index
    %c0_5 = arith.constant 0 : index
    %3 = vector.load %arg4[%c0, %c0_5] : memref<16x32xf32, #tpu.memory_space<vmem>>, vector<16x32xf32>
    %cst = arith.constant 5.65685415 : f32
    %4 = vector.broadcast %cst : f32 to vector<16x32xf32>
    %5 = arith.mulf %3, %4 : vector<16x32xf32>
    %c0_6 = arith.constant 0 : index
    %c0_7 = arith.constant 0 : index
    %6 = vector.load %arg3[%c0_6, %c0_7] : memref<16x32xf32, #tpu.memory_space<vmem>>, vector<16x32xf32>
    tpu.vector_store %arg3[%c0_6, %c0_7], %5 {strides = array<i32>} : memref<16x32xf32, #tpu.memory_space<vmem>>, vector<16x32xf32>,
    return
  }
  func.func @transform_1(%arg0: i32, %arg1: memref<16xi32, #tpu.memory_space<smem>>) -> (i32, i32) {
    %c0_i32 = arith.constant 0 : i32
    %c0_i32_0 = arith.constant 0 : i32
    return %arg0, %c0_i32 : i32, i32
  }
}

</mosaic_0001>

<llo_original>
// kernel: tpu_custom_call.1
$region0: #{tpu_custom_call.1}
  #allocation0 [shape = 'u32[]', space=smem, size = 0x4, offset = 0x4, fixed_abs, tag = 'smem constant byte address 0x4 - core index']
  #allocation1 [shape = 'u32[72,128]{1,0:T(1,128)}', space=vmem, size = 0x9000, scoped, tag = 'internal scratch']
  #allocation2 [shape = 'f32[16,32]{1,0:T(8,128)}', space=vmem, size = 0x2000, scoped, tag = 'scratch operand']
  #allocation3 [shape = 's32[8]{0}', space=sflag, size = 0x20, scoped, tag = 'scratch operand']
  #allocation4 [shape = 's32[1]{0}', space=sflag, size = 0x4, scoped, tag = 'scoped memory for tpu_custom_call.1']
  #allocation5 [shape = 'u8[512]{0}', space=smem, size = 0x200, scoped, tag = 'prefetched SMEM operand 0']
  #allocation8 [shape = 's32[]', space=sflag, size = 0x4, offset = 0, fixed_abs, tag = 'sflag constant byte address 0x0 - dummy sync flag']
  #allocation9 [shape = 's32[]', space=sflag, size = 0x4, offset = 0, fixed_abs, tag = 'sflag constant byte address 0x0 - dummy sync flag']
  %s0 = inlined_call_operand.vmem [shape: s32[16], index: 0, kind: input, shape index: {}]
  %s1 = inlined_call_operand.vmem [shape: f32[64,32], index: 1, kind: input, shape index: {}]
  %s2 = inlined_call_operand.hbm [shape: f32[16,32], index: 2, kind: output, shape index: {}]
  %s3 = sld [smem:[#allocation0]]
  $region88: #{tpu_custom_call.1} parent=0
    _
  %s5 = ssub.s32 1, %s3
  %s6 = scalar_select 0, %s5, %s3
  %s8 = sshll.u32 %s0, 4
  %s9 = int_to_ptr.vmem [resolvable:$true] %s8
  %11 = dma.vmem_to_smem %s9, 16, [#allocation5], [#allocation4]
  %13 = dma.done [#allocation4], 16
  %14 = sfence
  $region1: #{tpu_custom_call.1} parent=0
    #allocation6 [shape = 'u8[8192]{0}', space=vmem, size = 0x2000, scoped, tag = 'output window, operand 0, single buffered']
    #allocation7 [shape = 's32[1]{0}', space=sflag, size = 0x4, scoped, tag = 'scoped memory for tpu_custom_call.1']
    %15 = vsyncpa [#allocation7], 0
    %s16 = smul.u32 0, 16
    loop: start=0, step=1, limit=8
    $region2: #{tpu_custom_call.1} parent=1 // loop_pre_header
      _
    $region3: #{tpu_custom_call.1} parent=1 // loop_header
      %s18 = sphi 0, %s22
      %p19 = scmp.ge.s32.totalorder %s18, 8
    $region4: #{tpu_custom_call.1} parent=1 // loop_header_branch
      %21 = sbr.rel (%p19) target = $region8
    $region5: #{tpu_custom_call.1} parent=1 // loop_body
      %s23 = sadd.s32 %s16, %s18
      %s24 = sld [smem:[#allocation5 + %s23]]
      %p25 = scmp.gt.s32.totalorder %s24, 0
      %s26 = scalar_select %p25, %s24, 0
      %p27 = scmp.lt.s32.totalorder %s26, 63
      %s28 = scalar_select %p27, %s26, 63
      %p29 = scmp.lt.s32.totalorder %s18, 0
      %s30 = ssub.s32 0, %s18
      %s31 = scalar_select %p29, %s30, %s18
      %s32 = sand.u32 %s31, 7
      %s33 = ssub.s32 0, %s32
      %s34 = scalar_select %p29, %s33, %s32
      %p35 = scmp.ne.s32.totalorder %s34, 0
      %p36 = scmp.lt.s32.totalorder %s34, 0
      %p37 = pnand %p36, %p35
      %p38 = pneg %p37
      %s39 = sadd.s32 %s34, 8
      %s40 = scalar_select %p38, %s39, %s34
      %s41 = scalar_lea.vmem %s1, %s28
      %s42 = scalar_lea.vmem [#allocation2], %s18
      %s43 = scalar_lea.sflag [#allocation3], %s40
      // Predicated region
      $region9: #{tpu_custom_call.1} parent=5 // pred_check
        _
      $region10: #{tpu_custom_call.1} parent=5 // pred_check_branch
        %45 = sbr.rel target = $region12
      $region11: #{tpu_custom_call.1} parent=5 // pred_region
        // Predicated region
        $region24: #{tpu_custom_call.1} parent=11 // pred_check
          _
        $region25: #{tpu_custom_call.1} parent=11 // pred_check_branch
          %61 = sbr.rel (0) target = $region27
        $region26: #{tpu_custom_call.1} parent=11 // pred_region
          %s63 = ssub.s32 2, 1
          loop: start=0, step=1, limit=1
          $region28: #{tpu_custom_call.1} parent=26 // loop_pre_header
            _
          $region29: #{tpu_custom_call.1} parent=26 // loop_header
            %s65 = sphi 0, %s69
            %p66 = scmp.ge.s32.totalorder %s65, 1
            %s70 = sphi %s41, %s41
            %s71 = sphi %s42, %s42
          $region30: #{tpu_custom_call.1} parent=26 // loop_header_branch
            %68 = sbr.rel (%p66) target = $region34
          $region31: #{tpu_custom_call.1} parent=26 // loop_body
            %v72 = vld [vmem:[%s70] sm:%s63]
            %73 = vst [vmem:[%s71] sm:%s63] %v72
          $region32: #{tpu_custom_call.1} parent=26 // loop_footer
            %s69 = sadd.s32 1, %s65
          $region33: #{tpu_custom_call.1} parent=26 // loop_footer_branch
            %64 = sbr.rel target = $region29
          $region34: #{tpu_custom_call.1} parent=26 // loop_exit
            _
        $region27: #{tpu_custom_call.1} parent=11 // pred_fallthru
          _
      $region12: #{tpu_custom_call.1} parent=5 // pred_fallthru
        _
      // Predicated region
      $region13: #{tpu_custom_call.1} parent=5 // pred_check
        _
      $region14: #{tpu_custom_call.1} parent=5 // pred_check_branch
        %47 = sbr.rel (0) target = $region16
      $region15: #{tpu_custom_call.1} parent=5 // pred_region
        %s49 = ssub.s32 2, 1
        loop: start=0, step=1, limit=1
        $region17: #{tpu_custom_call.1} parent=15 // loop_pre_header
          _
        $region18: #{tpu_custom_call.1} parent=15 // loop_header
          %s51 = sphi 0, %s55
          %p52 = scmp.ge.s32.totalorder %s51, 1
          %s56 = sphi %s41, %s41
          %s57 = sphi %s42, %s42
        $region19: #{tpu_custom_call.1} parent=15 // loop_header_branch
          %54 = sbr.rel (%p52) target = $region23
        $region20: #{tpu_custom_call.1} parent=15 // loop_body
          %v58 = vld [vmem:[%s56] sm:%s49]
          %59 = vst [vmem:[%s57] sm:%s49] %v58
        $region21: #{tpu_custom_call.1} parent=15 // loop_footer
          %s55 = sadd.s32 1, %s51
        $region22: #{tpu_custom_call.1} parent=15 // loop_footer_branch
          %50 = sbr.rel target = $region18
        $region23: #{tpu_custom_call.1} parent=15 // loop_exit
          _
      $region16: #{tpu_custom_call.1} parent=5 // pred_fallthru
        _
      // Predicated region
      $region35: #{tpu_custom_call.1} parent=5 // pred_check
        _
      $region36: #{tpu_custom_call.1} parent=5 // pred_check_branch
        %76 = sbr.rel (0) target = $region38
      $region37: #{tpu_custom_call.1} parent=5 // pred_region
        %77 = vsyncadd %s43, 16
      $region38: #{tpu_custom_call.1} parent=5 // pred_fallthru
        _
    $region6: #{tpu_custom_call.1} parent=1 // loop_footer
      %s22 = sadd.s32 1, %s18
    $region7: #{tpu_custom_call.1} parent=1 // loop_footer_branch
      %17 = sbr.rel target = $region3
    $region8: #{tpu_custom_call.1} parent=1 // loop_exit
      _
    loop: start=0, step=1, limit=16
    $region39: #{tpu_custom_call.1} parent=1 // loop_pre_header
      _
    $region40: #{tpu_custom_call.1} parent=1 // loop_header
      %s79 = sphi 0, %s83
      %p80 = scmp.ge.s32.totalorder %s79, 16
    $region41: #{tpu_custom_call.1} parent=1 // loop_header_branch
      %82 = sbr.rel (%p80) target = $region45
    $region42: #{tpu_custom_call.1} parent=1 // loop_body
      %p84 = scmp.lt.s32.totalorder %s79, 0
      %s85 = ssub.s32 0, %s79
      %s86 = scalar_select %p84, %s85, %s79
      %s87 = sand.u32 %s86, 7
      %s88 = ssub.s32 0, %s87
      %s89 = scalar_select %p84, %s88, %s87
      %p90 = scmp.ne.s32.totalorder %s89, 0
      %p91 = scmp.lt.s32.totalorder %s89, 0
      %p92 = pnand %p91, %p90
      %p93 = pneg %p92
      %s94 = sadd.s32 %s89, 8
      %s95 = scalar_select %p93, %s94, %s89
      %s96 = scalar_lea.sflag [#allocation3], %s95
      %98 = dma.done %s96, 16
      %s99 = sadd.s32 %s79, 8
      %p100 = scmp.lt.s32.totalorder %s99, 16
      // Predicated region
      $region46: #{tpu_custom_call.1} parent=42 // pred_check
        %p101 = pneg %p100
      $region47: #{tpu_custom_call.1} parent=42 // pred_check_branch
        %103 = sbr.rel (%p101) target = $region49
      $region48: #{tpu_custom_call.1} parent=42 // pred_region
        %s104 = sadd.s32 %s16, %s99
        %s105 = sld [smem:[#allocation5 + %s104]]
        %p106 = scmp.gt.s32.totalorder %s105, 0
        %s107 = scalar_select %p106, %s105, 0
        %p108 = scmp.lt.s32.totalorder %s107, 63
        %s109 = scalar_select %p108, %s107, 63
        %p110 = scmp.lt.s32.totalorder %s99, 0
        %s111 = ssub.s32 0, %s99
        %s112 = scalar_select %p110, %s111, %s99
        %s113 = sand.u32 %s112, 7
        %s114 = ssub.s32 0, %s113
        %s115 = scalar_select %p110, %s114, %s113
        %p116 = scmp.ne.s32.totalorder %s115, 0
        %p117 = scmp.lt.s32.totalorder %s115, 0
        %p118 = pnand %p117, %p116
        %p119 = pneg %p118
        %s120 = sadd.s32 %s115, 8
        %s121 = scalar_select %p119, %s120, %s115
        %s122 = scalar_lea.vmem %s1, %s109
        %s123 = scalar_lea.vmem [#allocation2], %s99
        %s124 = scalar_lea.sflag [#allocation3], %s121
        // Predicated region
        $region50: #{tpu_custom_call.1} parent=48 // pred_check
          _
        $region51: #{tpu_custom_call.1} parent=48 // pred_check_branch
          %126 = sbr.rel target = $region53
        $region52: #{tpu_custom_call.1} parent=48 // pred_region
          // Predicated region
          $region65: #{tpu_custom_call.1} parent=52 // pred_check
            _
          $region66: #{tpu_custom_call.1} parent=52 // pred_check_branch
            %142 = sbr.rel (0) target = $region68
          $region67: #{tpu_custom_call.1} parent=52 // pred_region
            %s144 = ssub.s32 2, 1
            loop: start=0, step=1, limit=1
            $region69: #{tpu_custom_call.1} parent=67 // loop_pre_header
              _
            $region70: #{tpu_custom_call.1} parent=67 // loop_header
              %s146 = sphi 0, %s150
              %p147 = scmp.ge.s32.totalorder %s146, 1
              %s151 = sphi %s122, %s122
              %s152 = sphi %s123, %s123
            $region71: #{tpu_custom_call.1} parent=67 // loop_header_branch
              %149 = sbr.rel (%p147) target = $region75
            $region72: #{tpu_custom_call.1} parent=67 // loop_body
              %v153 = vld [vmem:[%s151] sm:%s144]
              %154 = vst [vmem:[%s152] sm:%s144] %v153
            $region73: #{tpu_custom_call.1} parent=67 // loop_footer
              %s150 = sadd.s32 1, %s146
            $region74: #{tpu_custom_call.1} parent=67 // loop_footer_branch
              %145 = sbr.rel target = $region70
            $region75: #{tpu_custom_call.1} parent=67 // loop_exit
              _
          $region68: #{tpu_custom_call.1} parent=52 // pred_fallthru
            _
        $region53: #{tpu_custom_call.1} parent=48 // pred_fallthru
          _
        // Predicated region
        $region54: #{tpu_custom_call.1} parent=48 // pred_check
          _
        $region55: #{tpu_custom_call.1} parent=48 // pred_check_branch
          %128 = sbr.rel (0) target = $region57
        $region56: #{tpu_custom_call.1} parent=48 // pred_region
          %s130 = ssub.s32 2, 1
          loop: start=0, step=1, limit=1
          $region58: #{tpu_custom_call.1} parent=56 // loop_pre_header
            _
          $region59: #{tpu_custom_call.1} parent=56 // loop_header
            %s132 = sphi 0, %s136
            %p133 = scmp.ge.s32.totalorder %s132, 1
            %s137 = sphi %s122, %s122
            %s138 = sphi %s123, %s123
          $region60: #{tpu_custom_call.1} parent=56 // loop_header_branch
            %135 = sbr.rel (%p133) target = $region64
          $region61: #{tpu_custom_call.1} parent=56 // loop_body
            %v139 = vld [vmem:[%s137] sm:%s130]
            %140 = vst [vmem:[%s138] sm:%s130] %v139
          $region62: #{tpu_custom_call.1} parent=56 // loop_footer
            %s136 = sadd.s32 1, %s132
          $region63: #{tpu_custom_call.1} parent=56 // loop_footer_branch
            %131 = sbr.rel target = $region59
          $region64: #{tpu_custom_call.1} parent=56 // loop_exit
            _
        $region57: #{tpu_custom_call.1} parent=48 // pred_fallthru
          _
        // Predicated region
        $region76: #{tpu_custom_call.1} parent=48 // pred_check
          _
        $region77: #{tpu_custom_call.1} parent=48 // pred_check_branch
          %157 = sbr.rel (0) target = $region79
        $region78: #{tpu_custom_call.1} parent=48 // pred_region
          %158 = vsyncadd %s124, 16
        $region79: #{tpu_custom_call.1} parent=48 // pred_fallthru
          _
      $region49: #{tpu_custom_call.1} parent=42 // pred_fallthru
        _
    $region43: #{tpu_custom_call.1} parent=1 // loop_footer
      %s83 = sadd.s32 1, %s79
    $region44: #{tpu_custom_call.1} parent=1 // loop_footer_branch
      %78 = sbr.rel target = $region40
    $region45: #{tpu_custom_call.1} parent=1 // loop_exit
      _
    %v159 = vld [vmem:[#allocation2] sm:$0xff]
    %v160 = vld [vmem:[#allocation2 + $0x8] sm:$0xff]
    %v161 = vmul.f32 %v159, 5.656854
    %v162 = vmul.f32 %v160, 5.656854
    %vm163 = vcmask 261120
    %164 = vst.msk [vmem:[#allocation6] sm:$0xff] %vm163, %v161
    %165 = vst.msk [vmem:[#allocation6 + $0x8] sm:$0xff] %vm163, %v162
    // Predicated region
    $region80: #{tpu_custom_call.1} parent=1 // pred_check
      _
    $region81: #{tpu_custom_call.1} parent=1 // pred_check_branch
      %167 = sbr.rel (0) target = $region83
    $region82: #{tpu_custom_call.1} parent=1 // pred_region
      %169 = vsyncadd [#allocation7], 0
      %s170 = sshll.u32 [#allocation6], 4
      %s171 = int_to_ptr.vmem [resolvable:$true] %s170
      %s172 = sshll.u32 %s2, 4
      %s173 = int_to_ptr.hbm [resolvable:$true] %s172
      %178 = dma.vmem_to_hbm [thread:$0]  %s171, 256, %s173, [#allocation7], 128, 128, 8
    $region83: #{tpu_custom_call.1} parent=1 // pred_fallthru
      _
    // Predicated region
    $region84: #{tpu_custom_call.1} parent=1 // pred_check
      _
    $region85: #{tpu_custom_call.1} parent=1 // pred_check_branch
      %180 = sbr.rel (0) target = $region87
    $region86: #{tpu_custom_call.1} parent=1 // pred_region
      %182 = dma.done [#allocation7], 256
    $region87: #{tpu_custom_call.1} parent=1 // pred_fallthru
      _
    %183 = vsyncpa [#allocation7], 1
  %184 = vsyncmov [#allocation3]
  %s185 = vpop.sfrf %184
  %p186 = scmp.eq.s32.totalorder %s185, 0
  %p187 = pneg %p186
  %189 = shalt.err (%p187)
  %s190 = scalar_lea.sflag [#allocation3], 1
  %191 = vsyncmov %s190
  %s192 = vpop.sfrf %191
  %p193 = scmp.eq.s32.totalorder %s192, 0
  %p194 = pneg %p193
  %196 = shalt.err (%p194)
  %s197 = scalar_lea.sflag [#allocation3], 2
  %198 = vsyncmov %s197
  %s199 = vpop.sfrf %198
  %p200 = scmp.eq.s32.totalorder %s199, 0
  %p201 = pneg %p200
  %203 = shalt.err (%p201)
  %s204 = scalar_lea.sflag [#allocation3], 3
  %205 = vsyncmov %s204
  %s206 = vpop.sfrf %205
  %p207 = scmp.eq.s32.totalorder %s206, 0
  %p208 = pneg %p207
  %210 = shalt.err (%p208)
  %s211 = scalar_lea.sflag [#allocation3], 4
  %212 = vsyncmov %s211
  %s213 = vpop.sfrf %212
  %p214 = scmp.eq.s32.totalorder %s213, 0
  %p215 = pneg %p214
  %217 = shalt.err (%p215)
  %s218 = scalar_lea.sflag [#allocation3], 5
  %219 = vsyncmov %s218
  %s220 = vpop.sfrf %219
  %p221 = scmp.eq.s32.totalorder %s220, 0
  %p222 = pneg %p221
  %224 = shalt.err (%p222)
  %s225 = scalar_lea.sflag [#allocation3], 6
  %226 = vsyncmov %s225
  %s227 = vpop.sfrf %226
  %p228 = scmp.eq.s32.totalorder %s227, 0
  %p229 = pneg %p228
  %231 = shalt.err (%p229)
  %s232 = scalar_lea.sflag [#allocation3], 7
  %233 = vsyncmov %s232
  %s234 = vpop.sfrf %233
  %p235 = scmp.eq.s32.totalorder %s234, 0
  %p236 = pneg %p235
  %238 = shalt.err (%p236)

</llo_original>
